<compile_context>
chip_gen: v5e
topology: v5e:2x2
jax: 0.10.0
libtpu: 0.0.40
codegen_flags: <defaults>
</compile_context>

<pallas_src>
import functools

import jax
import jax.numpy as jnp
from jax import lax
from jax.experimental import pallas as pl
from jax.experimental.pallas import tpu as pltpu


def _round_up(v, m):
    return ((v + m - 1) // m) * m


def _focal_weight(one_minus_pt, gamma):
    """(1 - pt) ** gamma; small integer gamma via VPU multiplies, else pow."""
    g = float(gamma)
    if g == 0.0:
        return jnp.ones_like(one_minus_pt)
    if g.is_integer() and 0 < g <= 8:
        w = one_minus_pt
        for _ in range(int(g) - 1):
            w = w * one_minus_pt
        return w
    # Non-integer gamma: pow == exp(g*log(u)); clamp so log stays finite at pt==1.
    return jnp.exp(g * jnp.log(jnp.maximum(one_minus_pt, 1e-30)))


def _focal_loss_kernel(logits_ref, tgt_ref, out_ref, *, alpha, gamma,
                       ignore_index, n_rows, tile_n):
    i = pl.program_id(0)
    # logits block: (C, tile_n) -- classes on sublanes, rows on lanes.
    x = logits_ref[...].astype(jnp.float32)
    t = tgt_ref[...]                                    # (1, tile_n) int32

    # Column validity: inside the real row range (handles the partial last tile
    # without any wrapper padding) and not the ignore_index.
    col = lax.broadcasted_iota(jnp.int32, t.shape, 1) + i * tile_n
    valid = (col < n_rows) & (t != ignore_index)

    # Numerically stable softmax pieces over the class axis (sublanes).
    m = jnp.max(x, axis=0, keepdims=True)               # (1, tile_n)
    e = jnp.exp(x - m)                                   # (C, tile_n): only big EUP op
    z = jnp.sum(e, axis=0, keepdims=True)                # (1, tile_n)

    # Target-class gather via one-hot compare (no dynamic gather, no MXU).
    cls = lax.broadcasted_iota(jnp.int32, x.shape, 0)    # (C, tile_n)
    onehot = cls == t                                     # broadcast over classes
    tgt_logit = jnp.sum(jnp.where(onehot, x, 0.0), axis=0, keepdims=True)
    tgt_e = jnp.sum(jnp.where(onehot, e, 0.0), axis=0, keepdims=True)

    ce = jnp.log(z) + m - tgt_logit                      # (1, tile_n)
    pt = tgt_e / z                                       # == exp(-ce), reuses e
    f_loss = alpha * _focal_weight(jnp.maximum(1.0 - pt, 0.0), gamma) * ce
    f_loss = jnp.where(valid, f_loss, 0.0)

    # Fold this tile's lane groups into one dense (8, 128) partial-sum block:
    # 8 independent accumulators (one per output sublane), each summing every
    # 8th 128-lane group -> short, independent VPU chains + full unmasked store.
    k = tile_n // 128
    accs = []
    for s in range(8):
        if s < k:
            acc = f_loss[:, s * 128:(s + 1) * 128]
            for g in range(s + 8, k, 8):
                acc = acc + f_loss[:, g * 128:(g + 1) * 128]
        else:
            acc = jnp.zeros((1, 128), jnp.float32)
        accs.append(acc)
    out_ref[...] = jnp.concatenate(accs, axis=0)         # (8, 128)


def _select_tile(n_rows, n_classes, itemsize):
    """Pick tile_n (rows per grid step) and a VMEM limit, generation-aware."""
    try:
        vmem_cap = int(pltpu.get_tpu_info().vmem_capacity_bytes)
    except Exception:
        vmem_cap = 64 * 1024 * 1024        # conservative (v7x per-TC VMEM)

    # Rough per-row VMEM bytes: double-buffered logits + (sublane-padded)
    # targets blocks, ~6 class-wide f32 temporaries Mosaic materializes
    # (astype / x-m / exp / onehot / selects), and ~8 row-wise padded temps.
    bytes_per_row = (2 * (n_classes * itemsize + 8 * 4)
                     + 6 * n_classes * 4
                     + 8 * 8 * 4)

    # Conservative budget (half of VMEM) for choosing the tile; the compiler
    # limit below gets more headroom.
    vmem_budget = vmem_cap // 2

    # HBM-amortization target: ~3 MiB of logits per grid step.
    target_rows = (3 * 1024 * 1024) // max(1, n_classes * itemsize)

    tile_n = min(target_rows, max(128, vmem_budget // bytes_per_row))
    # Megacore / pipelining: aim for >= 8 grid steps when N is large enough.
    tile_n = min(tile_n, _round_up((n_rows + 7) // 8, 128))
    tile_n = min(tile_n, _round_up(max(n_rows, 1), 128))
    tile_n = max(128, (tile_n // 128) * 128)
    # TODO(synk): for vocab-scale C where even tile_n=128 overflows VMEM, add a
    # class-axis grid dimension with an online (running max/sum) logsumexp.

    per_tile_bytes = tile_n * bytes_per_row
    vmem_limit = int(min(int(0.85 * vmem_cap),
                         max(32 * 1024 * 1024, 2 * per_tile_bytes)))
    return tile_n, vmem_limit


def focal_loss(logits, targets, *, alpha=1.0, gamma=2.0, ignore_index=-1,
               reduction="mean"):
    """logits: (..., C) float; targets: (...) int.  Mirrors torch FocalLoss."""
    if reduction not in ("mean", "sum"):
        # TODO(synk): reduction='none' in the torch module returns a
        # dynamically-sized (filtered) per-row loss tensor; no static-shape
        # Pallas/JAX equivalent.
        raise NotImplementedError("reduction must be 'mean' or 'sum'")

    C = logits.shape[-1]
    x = logits.reshape(-1, C)
    t = targets.reshape(-1).astype(jnp.int32)
    N = x.shape[0]
    itemsize = jnp.dtype(x.dtype).itemsize

    tile_n, vmem_limit = _select_tile(N, C, itemsize)
    num_tiles = max(1, -(-N // tile_n))

    # Lane-dense presentation: rows -> lanes, classes -> sublanes.
    # TODO(synk): this transpose is one extra HBM read+write pass over the
    # logits; a producer emitting (C, N) directly (or a packed-lane kernel
    # variant) would remove it.
    x_t = x.T                        # (C, N)
    t_row = t.reshape(1, N)          # (1, N)

    kernel = functools.partial(
        _focal_loss_kernel, alpha=float(alpha), gamma=float(gamma),
        ignore_index=int(ignore_index), n_rows=N, tile_n=tile_n)

    partials = pl.pallas_call(
        kernel,
        out_shape=jax.ShapeDtypeStruct((num_tiles * 8, 128), jnp.float32),
        grid_spec=pltpu.PrefetchScalarGridSpec(
            num_scalar_prefetch=0,
            grid=(num_tiles,),
            in_specs=[
                pl.BlockSpec((C, tile_n), lambda i: (0, i)),
                pl.BlockSpec((1, tile_n), lambda i: (0, i)),
            ],
            out_specs=pl.BlockSpec((8, 128), lambda i: (i, 0)),
        ),
        compiler_params=pltpu.CompilerParams(
            dimension_semantics=("parallel",),
            vmem_limit_bytes=vmem_limit),
    )(x_t, t_row)

    total = jnp.sum(partials)
    if reduction == "sum":
        return total
    # Valid-row count on the (C x smaller) targets, outside the kernel.
    count = jnp.sum((t != ignore_index).astype(jnp.float32))
    return total / jnp.maximum(count, 1.0)


def focal_loss_ref(logits, targets, *, alpha=1.0, gamma=2.0, ignore_index=-1,
                   reduction="mean"):
    """Pure-JAX reference mirroring the PyTorch module."""
    C = logits.shape[-1]
    x = logits.reshape(-1, C).astype(jnp.float32)
    t = targets.reshape(-1).astype(jnp.int32)
    valid = t != ignore_index
    logz = jax.nn.logsumexp(x, axis=-1)
    tgt_logit = jnp.take_along_axis(x, jnp.clip(t, 0)[:, None], axis=-1)[:, 0]
    ce = logz - tgt_logit
    pt = jnp.exp(-ce)
    fl = alpha * (1.0 - pt) ** gamma * ce
    fl = jnp.where(valid, fl, 0.0)
    if reduction == "sum":
        return jnp.sum(fl)
    return jnp.sum(fl) / jnp.maximum(jnp.sum(valid.astype(jnp.float32)), 1.0)


if __name__ == "__main__":
    key = jax.random.PRNGKey(0)
    k1, k2, k3, k4 = jax.random.split(key, 4)

    # Shapes consistent with the module's usage (batch, seq, num_classes).
    batch, seq, num_classes = 2, 8, 16            # N = 16 rows after flatten
    logits = jax.random.normal(k1, (batch, seq, num_classes), dtype=jnp.float32)
    targets = jax.random.randint(k2, (batch, seq), 0, num_classes, dtype=jnp.int32)
    # sprinkle some ignore_index entries
    targets = targets.at[0, 0].set(-1).at[1, 3].set(-1)

    out = jax.block_until_ready(focal_loss(logits, targets))
    ref = jax.block_until_ready(focal_loss_ref(logits, targets))
    assert jnp.allclose(out, ref, rtol=1e-5, atol=1e-5), (out, ref)

    out_s = jax.block_until_ready(focal_loss(logits, targets, reduction="sum"))
    ref_s = jax.block_until_ready(focal_loss_ref(logits, targets, reduction="sum"))
    assert jnp.allclose(out_s, ref_s, rtol=1e-5, atol=1e-5), (out_s, ref_s)

    # Second config: N not a multiple of 128 (exercises in-kernel tail masking).
    b2, s2, c2 = 3, 7, 11
    logits2 = jax.random.normal(k3, (b2, s2, c2), dtype=jnp.float32)
    targets2 = jax.random.randint(k4, (b2, s2), 0, c2, dtype=jnp.int32)
    targets2 = targets2.at[2, 5].set(-1)
    out2 = jax.block_until_ready(focal_loss(logits2, targets2))
    ref2 = jax.block_until_ready(focal_loss_ref(logits2, targets2))
    assert jnp.allclose(out2, ref2, rtol=1e-5, atol=1e-5), (out2, ref2)

    print("KERNEL_OK")
</pallas_src>

<mosaic_0001>
module attributes {stable_mosaic.version = 11 : i64} {
  func.func @_focal_loss_kernel(%arg0: i32, %arg1: memref<16x128xf32, #tpu.memory_space<vmem>>, %arg2: memref<1x128xi32, #tpu.memory_space<vmem>>, %arg3: memref<8x128xf32, #tpu.memory_space<vmem>>) attributes {dimension_semantics = [#tpu.dimension_semantics<parallel>], iteration_bounds = array<i64: 1>, scalar_prefetch = 0 : i64, scratch_operands = 0 : i64, tpu.core_type = #tpu.core_type<tc>, window_params = [{transform_indices = @transform_0, window_bounds = array<i64: 16, 128>}, {transform_indices = @transform_1, window_bounds = array<i64: 1, 128>}, {transform_indices = @transform_2, window_bounds = array<i64: 8, 128>}]} {
    %c0 = arith.constant 0 : index
    %c0_0 = arith.constant 0 : index
    %0 = vector.load %arg1[%c0, %c0_0] : memref<16x128xf32, #tpu.memory_space<vmem>>, vector<16x128xf32>
    %c0_1 = arith.constant 0 : index
    %c0_2 = arith.constant 0 : index
    %1 = vector.load %arg2[%c0_1, %c0_2] : memref<1x128xi32, #tpu.memory_space<vmem>>, vector<1x128xi32>
    %2 = tpu.iota {dimensions = array<i32: 1>} : vector<1x128xi32>
    %c128_i32 = arith.constant 128 : i32
    %3 = arith.muli %arg0, %c128_i32 : i32
    %4 = vector.broadcast %3 : i32 to vector<1x128xi32>
    %5 = arith.addi %2, %4 : vector<1x128xi32>
    %c16_i32 = arith.constant 16 : i32
    %6 = vector.broadcast %c16_i32 : i32 to vector<1x128xi32>
    %7 = arith.cmpi slt, %5, %6 : vector<1x128xi32>
    %c-1_i32 = arith.constant -1 : i32
    %8 = vector.broadcast %c-1_i32 : i32 to vector<1x128xi32>
    %9 = arith.cmpi ne, %1, %8 : vector<1x128xi32>
    %10 = arith.andi %7, %9 : vector<1x128xi1>
    %cst = arith.constant dense<0xFF800000> : vector<128xf32>
    %11 = vector.multi_reduction <maximumf>, %0, %cst [0] : vector<16x128xf32> to vector<128xf32>
    %12 = vector.shape_cast %11 : vector<128xf32> to vector<1x128xf32>
    %13 = vector.broadcast %12 : vector<1x128xf32> to vector<16x128xf32>
    %14 = arith.subf %0, %13 : vector<16x128xf32>
    %15 = math.exp %14 : vector<16x128xf32>
    %cst_3 = arith.constant dense<0.000000e+00> : vector<128xf32>
    %16 = vector.multi_reduction <add>, %15, %cst_3 [0] : vector<16x128xf32> to vector<128xf32>
    %17 = vector.shape_cast %16 : vector<128xf32> to vector<1x128xf32>
    %18 = tpu.iota {dimensions = array<i32: 0>} : vector<16x128xi32>
    %19 = vector.broadcast %1 : vector<1x128xi32> to vector<16x128xi32>
    %20 = arith.cmpi eq, %18, %19 : vector<16x128xi32>
    %cst_4 = arith.constant 0.000000e+00 : f32
    %21 = vector.broadcast %cst_4 : f32 to vector<16x128xf32>
    %22 = arith.select %20, %0, %21 : vector<16x128xi1>, vector<16x128xf32>
    %cst_5 = arith.constant dense<0.000000e+00> : vector<128xf32>
    %23 = vector.multi_reduction <add>, %22, %cst_5 [0] : vector<16x128xf32> to vector<128xf32>
    %24 = vector.shape_cast %23 : vector<128xf32> to vector<1x128xf32>
    %cst_6 = arith.constant 0.000000e+00 : f32
    %25 = vector.broadcast %cst_6 : f32 to vector<16x128xf32>
    %26 = arith.select %20, %15, %25 : vector<16x128xi1>, vector<16x128xf32>
    %cst_7 = arith.constant dense<0.000000e+00> : vector<128xf32>
    %27 = vector.multi_reduction <add>, %26, %cst_7 [0] : vector<16x128xf32> to vector<128xf32>
    %28 = vector.shape_cast %27 : vector<128xf32> to vector<1x128xf32>
    %29 = math.log %17 : vector<1x128xf32>
    %30 = arith.addf %29, %12 : vector<1x128xf32>
    %31 = arith.subf %30, %24 : vector<1x128xf32>
    %32 = arith.divf %28, %17 : vector<1x128xf32>
    %cst_8 = arith.constant 1.000000e+00 : f32
    %33 = vector.broadcast %cst_8 : f32 to vector<1x128xf32>
    %34 = arith.subf %33, %32 : vector<1x128xf32>
    %cst_9 = arith.constant 0.000000e+00 : f32
    %35 = vector.broadcast %cst_9 : f32 to vector<1x128xf32>
    %36 = arith.maximumf %34, %35 : vector<1x128xf32>
    %37 = arith.mulf %36, %36 : vector<1x128xf32>
    %cst_10 = arith.constant 1.000000e+00 : f32
    %38 = vector.broadcast %cst_10 : f32 to vector<1x128xf32>
    %39 = arith.mulf %38, %37 : vector<1x128xf32>
    %40 = arith.mulf %39, %31 : vector<1x128xf32>
    %cst_11 = arith.constant 0.000000e+00 : f32
    %41 = vector.broadcast %cst_11 : f32 to vector<1x128xf32>
    %42 = arith.select %10, %40, %41 : vector<1x128xi1>, vector<1x128xf32>
    %cst_12 = arith.constant 0.000000e+00 : f32
    %43 = vector.broadcast %cst_12 : f32 to vector<1x128xf32>
    %cst_13 = arith.constant 0.000000e+00 : f32
    %44 = vector.broadcast %cst_13 : f32 to vector<1x128xf32>
    %cst_14 = arith.constant 0.000000e+00 : f32
    %45 = vector.broadcast %cst_14 : f32 to vector<1x128xf32>
    %cst_15 = arith.constant 0.000000e+00 : f32
    %46 = vector.broadcast %cst_15 : f32 to vector<1x128xf32>
    %cst_16 = arith.constant 0.000000e+00 : f32
    %47 = vector.broadcast %cst_16 : f32 to vector<1x128xf32>
    %cst_17 = arith.constant 0.000000e+00 : f32
    %48 = vector.broadcast %cst_17 : f32 to vector<1x128xf32>
    %cst_18 = arith.constant 0.000000e+00 : f32
    %49 = vector.broadcast %cst_18 : f32 to vector<1x128xf32>
    %50 = tpu.concatenate %42, %43, %44, %45, %46, %47, %48, %49 in 0 : vector<1x128xf32>, vector<1x128xf32>, vector<1x128xf32>, vector<1x128xf32>, vector<1x128xf32>, vector<1x128xf32>, vector<1x128xf32>, vector<1x128xf32> -> vector<8x128xf32>
    %c0_19 = arith.constant 0 : index
    %c0_20 = arith.constant 0 : index
    %51 = vector.load %arg3[%c0_19, %c0_20] : memref<8x128xf32, #tpu.memory_space<vmem>>, vector<8x128xf32>
    tpu.vector_store %arg3[%c0_19, %c0_20], %50 {strides = array<i32>} : memref<8x128xf32, #tpu.memory_space<vmem>>, vector<8x128xf32>,
    return
  }
  func.func @transform_0(%arg0: i32) -> (i32, i32) {
    %c0_i32 = arith.constant 0 : i32
    %c0_i32_0 = arith.constant 0 : i32
    return %c0_i32, %arg0 : i32, i32
  }
  func.func @transform_1(%arg0: i32) -> (i32, i32) {
    %c0_i32 = arith.constant 0 : i32
    %c0_i32_0 = arith.constant 0 : i32
    return %c0_i32, %arg0 : i32, i32
  }
  func.func @transform_2(%arg0: i32) -> (i32, i32) {
    %c0_i32 = arith.constant 0 : i32
    %c0_i32_0 = arith.constant 0 : i32
    return %arg0, %c0_i32 : i32, i32
  }
}

</mosaic_0001>

<llo_original>
// kernel: tpu_custom_call.1
$region0: #{tpu_custom_call.1}
  #allocation0 [shape = 'u32[]', space=smem, size = 0x4, offset = 0x4, fixed_abs, tag = 'smem constant byte address 0x4 - core index']
  #allocation1 [shape = 'u32[72,128]{1,0:T(1,128)}', space=vmem, size = 0x9000, scoped, tag = 'internal scratch']
  %s0 = inlined_call_operand.hbm [shape: f32[16,16], index: 0, kind: input, shape index: {}]
  %s1 = inlined_call_operand.hbm [shape: s32[1,16], index: 1, kind: input, shape index: {}]
  %s2 = inlined_call_operand.hbm [shape: f32[8,128], index: 2, kind: output, shape index: {}]
  %s3 = sld [smem:[#allocation0]]
  $region26: #{tpu_custom_call.1} parent=0
    _
  %s5 = ssub.s32 1, %s3
  %s6 = scalar_select 0, %s5, %s3
  $region1: #{tpu_custom_call.1} parent=0
    #allocation2 [shape = 'u8[8192]{0}', space=vmem, size = 0x2000, scoped, tag = 'input window, operand 0, single buffered']
    #allocation3 [shape = 's32[1]{0}', space=sflag, size = 0x4, scoped, tag = 'scoped memory for tpu_custom_call.1']
    #allocation4 [shape = 's32[1]{0}', space=sflag, size = 0x4, scoped, tag = 'scoped memory for tpu_custom_call.1']
    #allocation5 [shape = 'u8[512]{0}', space=vmem, size = 0x400, scoped, tag = 'input window, operand 1, single buffered']
    #allocation6 [shape = 's32[1]{0}', space=sflag, size = 0x4, scoped, tag = 'scoped memory for tpu_custom_call.1']
    #allocation7 [shape = 'u8[4096]{0}', space=vmem, size = 0x1000, scoped, tag = 'output window, operand 0, single buffered']
    %7 = vsyncpa [#allocation3], 0
    %8 = vsyncpa [#allocation6], 0
    %9 = vsyncpa [#allocation4], 0
    // Predicated region
    $region2: #{tpu_custom_call.1} parent=1 // pred_check
      _
    $region3: #{tpu_custom_call.1} parent=1 // pred_check_branch
      %11 = sbr.rel (0) target = $region5
    $region4: #{tpu_custom_call.1} parent=1 // pred_region
      %13 = vsyncadd [#allocation3], 0
      %s14 = sshll.u32 %s0, 4
      %s15 = int_to_ptr.hbm [resolvable:$true] %s14
      %s16 = sshll.u32 [#allocation2], 4
      %s17 = int_to_ptr.vmem [resolvable:$true] %s16
      %22 = dma.hbm_to_vmem [thread:$0]  %s15, 256, %s17, [#allocation3], 128, 128, 8
    $region5: #{tpu_custom_call.1} parent=1 // pred_fallthru
      _
    // Predicated region
    $region6: #{tpu_custom_call.1} parent=1 // pred_check
      _
    $region7: #{tpu_custom_call.1} parent=1 // pred_check_branch
      %24 = sbr.rel (0) target = $region9
    $region8: #{tpu_custom_call.1} parent=1 // pred_region
      %26 = vsyncadd [#allocation6], 0
      %s28 = sshll.u32 %s1, 4
      %s29 = int_to_ptr.hbm [resolvable:$true] %s28
      %s30 = sshll.u32 [#allocation5], 4
      %s31 = int_to_ptr.vmem [resolvable:$true] %s30
      %33 = dma.hbm_to_vmem [thread:$0]  %s29, 16, %s31, [#allocation6]
    $region9: #{tpu_custom_call.1} parent=1 // pred_fallthru
      _
    // Predicated region
    $region10: #{tpu_custom_call.1} parent=1 // pred_check
      _
    $region11: #{tpu_custom_call.1} parent=1 // pred_check_branch
      %35 = sbr.rel (0) target = $region13
    $region12: #{tpu_custom_call.1} parent=1 // pred_region
      %37 = dma.done [#allocation3], 256
    $region13: #{tpu_custom_call.1} parent=1 // pred_fallthru
      _
    // Predicated region
    $region14: #{tpu_custom_call.1} parent=1 // pred_check
      _
    $region15: #{tpu_custom_call.1} parent=1 // pred_check_branch
      %39 = sbr.rel (0) target = $region17
    $region16: #{tpu_custom_call.1} parent=1 // pred_region
      %41 = dma.done [#allocation6], 16
    $region17: #{tpu_custom_call.1} parent=1 // pred_fallthru
      _
    %v42 = vld [vmem:[#allocation2] sm:$0xff]
    %v43 = vld [vmem:[#allocation2 + $0x8] sm:$0xff]
    %v44 = vld [vmem:[#allocation5] sm:$0x1]
    %v45 = vlaneseq
    %v46 = vand.u32 %v45, 127
    %s47 = smul.u32 0, 128
    %v48 = vstv %s47
    %v49 = vadd.s32 %v46, %v48
    %vm50 = vcmp.lt.s32.totalorder %v49, 16
    %vm51 = vcmp.ne.s32.totalorder %v44, 4294967295
    %vm52 = vmand %vm50, %vm51
    %v53 = vmax.f32 %v42, %v43
    %v54 = vrot.slane %v53, 4
    %v55 = vmax.f32 %v53, %v54
    %v56 = vrot.slane %v55, 2
    %v57 = vmax.f32 %v55, %v56
    %v58 = vrot.slane %v57, 1
    %v59 = vmax.f32 %v57, %v58
    %v60 = vsub.f32 %v42, %v59
    %v61 = vsub.f32 %v43, %v59
    %v62 = vmul.f32 %v60, 1.442695
    %v63 = vpow.pop %v62
    %v64 = vmul.f32 %v61, 1.442695
    %v65 = vpow.pop %v64
    %v66 = vadd.f32 %v63, %v65
    %v67 = vrot.slane %v66, 4
    %v68 = vadd.f32 %v66, %v67
    %v69 = vrot.slane %v68, 2
    %v70 = vadd.f32 %v68, %v69
    %v71 = vrot.slane %v70, 1
    %v72 = vadd.f32 %v70, %v71
    %v73 = vlaneseq
    %v74 = vshrl.u32 %v73, 7
    %v75 = vadd.s32 %v74, 8
    %v76 = vperm.slane %v44, 0
    %vm77 = vcmp.eq.s32.totalorder %v74, %v76
    %vm78 = vcmp.eq.s32.totalorder %v75, %v76
    %v79 = vsel %vm77, %v42, 0.0
    %v80 = vsel %vm78, %v43, 0.0
    %v81 = vadd.f32 %v79, %v80
    %v82 = vrot.slane %v81, 4
    %v83 = vadd.f32 %v81, %v82
    %v84 = vrot.slane %v83, 2
    %v85 = vadd.f32 %v83, %v84
    %v86 = vrot.slane %v85, 1
    %v87 = vadd.f32 %v85, %v86
    %v88 = vsel %vm77, %v63, 0.0
    %v89 = vsel %vm78, %v65, 0.0
    %v90 = vadd.f32 %v88, %v89
    %v91 = vrot.slane %v90, 4
    %v92 = vadd.f32 %v90, %v91
    %v93 = vrot.slane %v92, 2
    %v94 = vadd.f32 %v92, %v93
    %v95 = vrot.slane %v94, 1
    %v96 = vadd.f32 %v94, %v95
    %v97 = vlog2.pop %v72
    %v98 = vmul.f32 %v97, 0.6931472
    %v99 = vadd.f32 %v98, %v59
    %v100 = vsub.f32 %v99, %v87
    %v101 = vrcp.pop %v72
    %v102 = vmul.f32 %v72, %v101
    %v103 = vsub.f32 1.0, %v102
    %v104 = vmul.f32 %v101, %v103
    %v105 = vadd.f32 %v101, %v104
    %vm106 = vweird.f32 %v72
    %vm107 = vweird.f32 %v101
    %vm108 = vmor %vm106, %vm107
    %v109 = vsel %vm108, %v101, %v105
    %v110 = vand.u32 2147483647, %v72
    %vm111 = vcmp.eq.f32.partialorder %v110, 8.507059e+37
    %v112 = vand.u32 %v72, 2147483648
    %v113 = vor.u32 1.1754944e-38, %v112
    %v114 = vsel %vm111, %v113, %v109
    %v115 = vmul.f32 %v96, %v114
    %v116 = vsub.f32 1.0, %v115
    %v117 = vmax.f32 %v116, 0.0
    %v118 = vmul.f32 %v117, %v117
    %v119 = vmul.f32 %v118, %v100
    %v120 = vsel %vm52, %v119, 0.0
    %vm121 = vcmask 1040384
    %v122 = vsel %vm121, %v120, 0.0
    %vm123 = vcmask 1041408
    %v124 = vsel %vm123, %v122, 0.0
    %vm125 = vcmask 1042432
    %v126 = vsel %vm125, %v124, 0.0
    %vm127 = vcmask 1043456
    %v128 = vsel %vm127, %v126, 0.0
    %vm129 = vcmask 1044480
    %v130 = vsel %vm129, %v128, 0.0
    %vm131 = vcmask 1045504
    %v132 = vsel %vm131, %v130, 0.0
    %vm133 = vcmask 1046528
    %v134 = vsel %vm133, %v132, 0.0
    %135 = vst [vmem:[#allocation7] sm:$0xff] %v134
    // Predicated region
    $region18: #{tpu_custom_call.1} parent=1 // pred_check
      _
    $region19: #{tpu_custom_call.1} parent=1 // pred_check_branch
      %137 = sbr.rel (0) target = $region21
    $region20: #{tpu_custom_call.1} parent=1 // pred_region
      %139 = vsyncadd [#allocation4], 0
      %s141 = sshll.u32 [#allocation7], 4
      %s142 = int_to_ptr.vmem [resolvable:$true] %s141
      %s143 = sshll.u32 %s2, 4
      %s144 = int_to_ptr.hbm [resolvable:$true] %s143
      %146 = dma.vmem_to_hbm [thread:$0]  %s142, 128, %s144, [#allocation4]
    $region21: #{tpu_custom_call.1} parent=1 // pred_fallthru
      _
    // Predicated region
    $region22: #{tpu_custom_call.1} parent=1 // pred_check
      _
    $region23: #{tpu_custom_call.1} parent=1 // pred_check_branch
      %148 = sbr.rel (0) target = $region25
    $region24: #{tpu_custom_call.1} parent=1 // pred_region
      %150 = dma.done [#allocation4], 128
    $region25: #{tpu_custom_call.1} parent=1 // pred_fallthru
      _
    %151 = vsyncpa [#allocation3], 1
    %152 = vsyncpa [#allocation6], 1
    %153 = vsyncpa [#allocation4], 1

</llo_original>
